<compile_context>
chip_gen: v7x
topology: tpu7x:2x2x1
jax: 0.10.0
libtpu: 0.0.40
codegen_flags: <defaults>
</compile_context>

<pallas_src>
import numpy as np

import jax
import jax.numpy as jnp
from jax import lax
from jax.experimental import pallas as pl
from jax.experimental.pallas import tpu as pltpu


def _next_along(x, axis, aligned):
    """y[..., i, ...] = x[..., (i+1) % n, ...] along `axis`.

    The wrapped position is masked out by the caller, only the "next element"
    positions matter.  When the plane is aligned to the native (8, 128) vreg
    tiling we use the XLU rotate (pltpu.roll); otherwise fall back to a
    concat-built shift (one relayout copy, still correct).
    """
    n = x.shape[axis]
    if aligned:
        # jnp.roll semantics: result[i] = x[(i - shift) % n]; shift = n - 1
        # (non-negative) brings the next element to position i.
        return pltpu.roll(x, shift=n - 1, axis=axis)
    if axis == 0:
        return jnp.concatenate([x[1:, :], x[:1, :]], axis=0)
    return jnp.concatenate([x[:, 1:], x[:, :1]], axis=1)


def _dice_kernel(pic_ref, dhn_ref, dwn_ref, stats_ref):
    x = pic_ref[0]                       # (H, W) raw pixels: H sublanes, W lanes
    h, w = x.shape
    aligned = (h % 8 == 0) and (w % 128 == 0)

    x_down = _next_along(x, 0, aligned)   # x[r+1, c]  (wrap row masked below)
    x_right = _next_along(x, 1, aligned)  # x[r, c+1]  (wrap col masked below)

    row = lax.broadcasted_iota(jnp.int32, (h, w), 0)
    col = lax.broadcasted_iota(jnp.int32, (h, w), 1)

    # Forward diffs of the RAW pixels; the (x - 0.5)/0.5 prep is folded away
    # (the offset cancels in the diff; the x2 scale only the stats need).
    # The masked positions are exactly the reference's zero padding, so the
    # full-plane min/max below already include the pad.
    dh = jnp.where(row < h - 1, x_down - x, 0.0)   # zero-padded last row
    dw = jnp.where(col < w - 1, x_right - x, 0.0)  # zero-padded last column

    h_min = jnp.min(dh, keepdims=True)             # (1, 1)
    h_std = jnp.max(dh, keepdims=True) - h_min
    w_min = jnp.min(dw, keepdims=True)
    w_std = jnp.max(dw, keepdims=True) - w_min

    # Per-channel reciprocal once, then vector multiplies.  Like the
    # reference, std == 0 (constant plane) yields inf/nan.
    inv_h = pl.reciprocal(h_std, approx=False)
    inv_w = pl.reciprocal(w_std, approx=False)

    # Single full-width (lane-dense, unmasked) store per output plane.
    dhn_ref[0] = (dh - h_min) * inv_h
    dwn_ref[0] = (dw - w_min) * inv_w

    # Per-channel stats packed into one aligned (8, 128) tile -> one store.
    # Lanes 0..3 = [diff_h_min, diff_h_std, diff_w_min, diff_w_std]; the x2 is
    # the (pic - 0.5)/0.5 prep scale folded out of the per-element path.
    lane = lax.broadcasted_iota(jnp.int32, (8, 128), 1)
    stats = jnp.where(
        lane == 0, 2.0 * h_min,
        jnp.where(lane == 1, 2.0 * h_std,
                  jnp.where(lane == 2, 2.0 * w_min, 2.0 * w_std)))
    stats_ref[0] = stats


def _dice_pallas(pic):
    """pic: (C, H, W) float32 -> (diff_h_norm, diff_w_norm, stats[C, 4])."""
    c, h, w = pic.shape
    plane_bytes = h * w * 4
    # 1 input + 2 output planes, double-buffered, plus in-register temporaries
    # (dh/dw/rolled/iota) and the tiny stats tile.
    vmem_limit = int(min(max(20 * plane_bytes + (1 << 20), 16 << 20), 64 << 20))

    plane_spec = pl.BlockSpec((1, h, w), lambda i: (i, 0, 0))
    dhn, dwn, stats = pl.pallas_call(
        _dice_kernel,
        grid=(c,),
        out_shape=(
            jax.ShapeDtypeStruct((c, h, w), jnp.float32),     # diff_h_norm
            jax.ShapeDtypeStruct((c, h, w), jnp.float32),     # diff_w_norm
            jax.ShapeDtypeStruct((c, 8, 128), jnp.float32),   # per-channel stats
        ),
        in_specs=[plane_spec],
        out_specs=(
            plane_spec,
            plane_spec,
            pl.BlockSpec((1, 8, 128), lambda i: (i, 0, 0)),
        ),
        compiler_params=pltpu.CompilerParams(
            dimension_semantics=("parallel",),
            vmem_limit_bytes=vmem_limit),
    )(pic)
    return dhn, dwn, stats[:, 0, :4]


def _top_lefts(h, w, size):
    h_slices, w_slices = h // size, w // size
    all_h = [i * size for i in range(h_slices)]
    all_w = [i * size for i in range(w_slices)]
    if h - h_slices * size > 0:
        all_h.append(h - size)
    if w - w_slices * size > 0:
        all_w.append(w - size)
    return [(t, l) for t in all_h for l in all_w]


from functools import partial


@partial(jax.jit, static_argnames=("size",))
def _dice_device(pic, size):
    """All device-side work in one executable: kernel + batched crops."""
    c, h, w = pic.shape
    diff_h_norm, diff_w_norm, stats = _dice_pallas(pic)

    tls = _top_lefts(h, w, size)
    t_arr = jnp.asarray([t for t, _ in tls], dtype=jnp.int32)
    l_arr = jnp.asarray([l for _, l in tls], dtype=jnp.int32)

    def crop_all(arr):
        def one(t, l):
            return lax.dynamic_slice(arr, (0, t, l), (c, size, size))
        return jax.vmap(one)(t_arr, l_arr)          # (n_crops, C, size, size)

    return stats, crop_all(pic), crop_all(diff_h_norm), crop_all(diff_w_norm)


def dice_forward(pic, size):
    """JAX/Pallas equivalent of Dice(size).forward(pic, random_slice=False)."""
    # The reference uses torch.squeeze(pic) to drop the batch=1 dim; squeeze
    # only axis 0 so a (1, 1, H, W) grayscale input keeps its channel axis.
    if pic.ndim == 4:
        pic = jnp.squeeze(pic, axis=0)
    pic = pic.astype(jnp.float32)
    c, h, w = pic.shape

    stats, img_crops, dh_crops, dw_crops = _dice_device(pic, size)

    # Single host sync for the four per-channel stat lists, issued only after
    # all device work has been dispatched.
    stats_np = np.asarray(jax.device_get(stats))     # (C, 4)
    data = {
        'diff_h_min_rgb': stats_np[:, 0].tolist(),
        'diff_h_std_rgb': stats_np[:, 1].tolist(),
        'diff_w_min_rgb': stats_np[:, 2].tolist(),
        'diff_w_std_rgb': stats_np[:, 3].tolist(),
        'height': h,
        'width': w,
    }
    tls = _top_lefts(h, w, size)
    data['slices'] = [
        (t, l, img_crops[i], dh_crops[i], dw_crops[i])
        for i, (t, l) in enumerate(tls)
    ]
    return data


def _dice_ref(pic):
    """Pure-JAX reference of the kernel math (prep + padded diffs + stats)."""
    c, h, w = pic.shape
    prep = (pic - 0.5) / 0.5
    dh = jnp.concatenate(
        [prep[:, 1:, :] - prep[:, :-1, :], jnp.zeros((c, 1, w), prep.dtype)], axis=1)
    dw = jnp.concatenate(
        [prep[:, :, 1:] - prep[:, :, :-1], jnp.zeros((c, h, 1), prep.dtype)], axis=2)
    h_min = dh.min(axis=(1, 2)); h_std = dh.max(axis=(1, 2)) - h_min
    w_min = dw.min(axis=(1, 2)); w_std = dw.max(axis=(1, 2)) - w_min
    dhn = (dh - h_min[:, None, None]) / h_std[:, None, None]
    dwn = (dw - w_min[:, None, None]) / w_std[:, None, None]
    stats = jnp.stack([h_min, h_std, w_min, w_std], axis=1)
    return dhn, dwn, stats


if __name__ == "__main__":
    key = jax.random.PRNGKey(0)
    # NCHW with batch=1 (forward squeezes it), 3 channels ("_rgb").
    # H=32 / W=128 keep W at the native 128-lane width (lane-dense stores,
    # aligned XLU rolls) while staying small.
    x = jax.random.uniform(key, (1, 3, 32, 128), dtype=jnp.float32)

    # --- kernel vs pure-JAX reference ---------------------------------------
    pic = jnp.squeeze(x, axis=0)
    dhn, dwn, stats = _dice_pallas(pic)
    jax.block_until_ready((dhn, dwn, stats))
    r_dhn, r_dwn, r_stats = _dice_ref(pic)
    np.testing.assert_allclose(np.asarray(dhn), np.asarray(r_dhn), rtol=1e-5, atol=1e-5)
    np.testing.assert_allclose(np.asarray(dwn), np.asarray(r_dwn), rtol=1e-5, atol=1e-5)
    np.testing.assert_allclose(np.asarray(stats), np.asarray(r_stats), rtol=1e-5, atol=1e-5)

    # --- end-to-end forward ---------------------------------------------------
    size = 16
    out = dice_forward(x, size=size)
    for s in out['slices']:
        jax.block_until_ready(s[2])
        jax.block_until_ready(s[3])
        jax.block_until_ready(s[4])

    assert out['height'] == 32 and out['width'] == 128
    assert len(out['slices']) == (32 // size) * (128 // size)
    assert out['slices'][0][2].shape == (3, size, size)
    assert len(out['diff_h_min_rgb']) == 3

    print("KERNEL_OK")
</pallas_src>

<mosaic_0001>
module attributes {stable_mosaic.version = 11 : i64} {
  func.func @_dice_kernel(%arg0: i32, %arg1: memref<1x32x128xf32, #tpu.memory_space<vmem>>, %arg2: memref<1x32x128xf32, #tpu.memory_space<vmem>>, %arg3: memref<1x32x128xf32, #tpu.memory_space<vmem>>, %arg4: memref<1x8x128xf32, #tpu.memory_space<vmem>>) attributes {dimension_semantics = [#tpu.dimension_semantics<parallel>], iteration_bounds = array<i64: 3>, scalar_prefetch = 0 : i64, scratch_operands = 0 : i64, tpu.core_type = #tpu.core_type<tc>, window_params = [{transform_indices = @transform_0, window_bounds = array<i64: 1, 32, 128>}, {transform_indices = @transform_1, window_bounds = array<i64: 1, 32, 128>}, {transform_indices = @transform_2, window_bounds = array<i64: 1, 32, 128>}, {transform_indices = @transform_3, window_bounds = array<i64: 1, 8, 128>}]} {
    %c0 = arith.constant 0 : index
    %c0_0 = arith.constant 0 : index
    %c0_1 = arith.constant 0 : index
    %0 = vector.load %arg1[%c0, %c0_0, %c0_1] : memref<1x32x128xf32, #tpu.memory_space<vmem>>, vector<1x32x128xf32>
    %1 = vector.shape_cast %0 : vector<1x32x128xf32> to vector<32x128xf32>
    %c31_i32 = arith.constant 31 : i32
    %2 = tpu.dynamic_rotate %1 by %c31_i32 dim 0 : vector<32x128xf32>, i32 -> vector<32x128xf32>
    %c127_i32 = arith.constant 127 : i32
    %3 = tpu.dynamic_rotate %1 by %c127_i32 dim 1 : vector<32x128xf32>, i32 -> vector<32x128xf32>
    %4 = tpu.iota {dimensions = array<i32: 0>} : vector<32x128xi32>
    %5 = tpu.iota {dimensions = array<i32: 1>} : vector<32x128xi32>
    %c31_i32_2 = arith.constant 31 : i32
    %6 = vector.broadcast %c31_i32_2 : i32 to vector<32x128xi32>
    %7 = arith.cmpi slt, %4, %6 : vector<32x128xi32>
    %8 = arith.subf %2, %1 : vector<32x128xf32>
    %cst = arith.constant 0.000000e+00 : f32
    %9 = vector.broadcast %cst : f32 to vector<32x128xf32>
    %10 = arith.select %7, %8, %9 : vector<32x128xi1>, vector<32x128xf32>
    %c127_i32_3 = arith.constant 127 : i32
    %11 = vector.broadcast %c127_i32_3 : i32 to vector<32x128xi32>
    %12 = arith.cmpi slt, %5, %11 : vector<32x128xi32>
    %13 = arith.subf %3, %1 : vector<32x128xf32>
    %cst_4 = arith.constant 0.000000e+00 : f32
    %14 = vector.broadcast %cst_4 : f32 to vector<32x128xf32>
    %15 = arith.select %12, %13, %14 : vector<32x128xi1>, vector<32x128xf32>
    %16 = vector.shape_cast %10 : vector<32x128xf32> to vector<1x32x128xf32>
    %cst_5 = arith.constant dense<0x7F800000> : vector<1xf32>
    %17 = vector.multi_reduction <minimumf>, %16, %cst_5 [1, 2] : vector<1x32x128xf32> to vector<1xf32>
    %18 = vector.shape_cast %17 : vector<1xf32> to vector<1x1x1xf32>
    %19 = vector.extract %18[0, 0, 0] : f32 from vector<1x1x1xf32>
    %20 = vector.broadcast %19 : f32 to vector<1x1xf32>
    %21 = vector.shape_cast %10 : vector<32x128xf32> to vector<1x32x128xf32>
    %cst_6 = arith.constant dense<0xFF800000> : vector<1xf32>
    %22 = vector.multi_reduction <maximumf>, %21, %cst_6 [1, 2] : vector<1x32x128xf32> to vector<1xf32>
    %23 = vector.shape_cast %22 : vector<1xf32> to vector<1x1x1xf32>
    %24 = vector.extract %23[0, 0, 0] : f32 from vector<1x1x1xf32>
    %25 = vector.broadcast %24 : f32 to vector<1x1xf32>
    %26 = arith.subf %25, %20 : vector<1x1xf32>
    %27 = vector.shape_cast %15 : vector<32x128xf32> to vector<1x32x128xf32>
    %cst_7 = arith.constant dense<0x7F800000> : vector<1xf32>
    %28 = vector.multi_reduction <minimumf>, %27, %cst_7 [1, 2] : vector<1x32x128xf32> to vector<1xf32>
    %29 = vector.shape_cast %28 : vector<1xf32> to vector<1x1x1xf32>
    %30 = vector.extract %29[0, 0, 0] : f32 from vector<1x1x1xf32>
    %31 = vector.broadcast %30 : f32 to vector<1x1xf32>
    %32 = vector.shape_cast %15 : vector<32x128xf32> to vector<1x32x128xf32>
    %cst_8 = arith.constant dense<0xFF800000> : vector<1xf32>
    %33 = vector.multi_reduction <maximumf>, %32, %cst_8 [1, 2] : vector<1x32x128xf32> to vector<1xf32>
    %34 = vector.shape_cast %33 : vector<1xf32> to vector<1x1x1xf32>
    %35 = vector.extract %34[0, 0, 0] : f32 from vector<1x1x1xf32>
    %36 = vector.broadcast %35 : f32 to vector<1x1xf32>
    %37 = arith.subf %36, %31 : vector<1x1xf32>
    %38 = tpu.reciprocal %26 : vector<1x1xf32> -> vector<1x1xf32>
    %39 = tpu.reciprocal %37 : vector<1x1xf32> -> vector<1x1xf32>
    %40 = vector.broadcast %20 : vector<1x1xf32> to vector<32x128xf32>
    %41 = arith.subf %10, %40 : vector<32x128xf32>
    %42 = vector.broadcast %38 : vector<1x1xf32> to vector<32x128xf32>
    %43 = arith.mulf %41, %42 : vector<32x128xf32>
    %c0_9 = arith.constant 0 : index
    %c0_10 = arith.constant 0 : index
    %c0_11 = arith.constant 0 : index
    %44 = vector.load %arg2[%c0_9, %c0_10, %c0_11] : memref<1x32x128xf32, #tpu.memory_space<vmem>>, vector<1x32x128xf32>
    %45 = vector.shape_cast %44 : vector<1x32x128xf32> to vector<32x128xf32>
    %46 = vector.shape_cast %43 : vector<32x128xf32> to vector<1x32x128xf32>
    tpu.vector_store %arg2[%c0_9, %c0_10, %c0_11], %46 {strides = array<i32>} : memref<1x32x128xf32, #tpu.memory_space<vmem>>, vector<1x32x128xf32>,
    %47 = vector.broadcast %31 : vector<1x1xf32> to vector<32x128xf32>
    %48 = arith.subf %15, %47 : vector<32x128xf32>
    %49 = vector.broadcast %39 : vector<1x1xf32> to vector<32x128xf32>
    %50 = arith.mulf %48, %49 : vector<32x128xf32>
    %c0_12 = arith.constant 0 : index
    %c0_13 = arith.constant 0 : index
    %c0_14 = arith.constant 0 : index
    %51 = vector.load %arg3[%c0_12, %c0_13, %c0_14] : memref<1x32x128xf32, #tpu.memory_space<vmem>>, vector<1x32x128xf32>
    %52 = vector.shape_cast %51 : vector<1x32x128xf32> to vector<32x128xf32>
    %53 = vector.shape_cast %50 : vector<32x128xf32> to vector<1x32x128xf32>
    tpu.vector_store %arg3[%c0_12, %c0_13, %c0_14], %53 {strides = array<i32>} : memref<1x32x128xf32, #tpu.memory_space<vmem>>, vector<1x32x128xf32>,
    %54 = tpu.iota {dimensions = array<i32: 1>} : vector<8x128xi32>
    %c0_i32 = arith.constant 0 : i32
    %55 = vector.broadcast %c0_i32 : i32 to vector<8x128xi32>
    %56 = arith.cmpi eq, %54, %55 : vector<8x128xi32>
    %cst_15 = arith.constant 2.000000e+00 : f32
    %57 = vector.broadcast %cst_15 : f32 to vector<1x1xf32>
    %58 = arith.mulf %57, %20 : vector<1x1xf32>
    %c1_i32 = arith.constant 1 : i32
    %59 = vector.broadcast %c1_i32 : i32 to vector<8x128xi32>
    %60 = arith.cmpi eq, %54, %59 : vector<8x128xi32>
    %cst_16 = arith.constant 2.000000e+00 : f32
    %61 = vector.broadcast %cst_16 : f32 to vector<1x1xf32>
    %62 = arith.mulf %61, %26 : vector<1x1xf32>
    %c2_i32 = arith.constant 2 : i32
    %63 = vector.broadcast %c2_i32 : i32 to vector<8x128xi32>
    %64 = arith.cmpi eq, %54, %63 : vector<8x128xi32>
    %cst_17 = arith.constant 2.000000e+00 : f32
    %65 = vector.broadcast %cst_17 : f32 to vector<1x1xf32>
    %66 = arith.mulf %65, %31 : vector<1x1xf32>
    %cst_18 = arith.constant 2.000000e+00 : f32
    %67 = vector.broadcast %cst_18 : f32 to vector<1x1xf32>
    %68 = arith.mulf %67, %37 : vector<1x1xf32>
    %69 = vector.shape_cast %66 : vector<1x1xf32> to vector<1x1xf32>
    %70 = vector.broadcast %69 : vector<1x1xf32> to vector<8x128xf32>
    %71 = vector.shape_cast %68 : vector<1x1xf32> to vector<1x1xf32>
    %72 = vector.broadcast %71 : vector<1x1xf32> to vector<8x128xf32>
    %73 = arith.select %64, %70, %72 : vector<8x128xi1>, vector<8x128xf32>
    %74 = vector.shape_cast %62 : vector<1x1xf32> to vector<1x1xf32>
    %75 = vector.broadcast %74 : vector<1x1xf32> to vector<8x128xf32>
    %76 = arith.select %60, %75, %73 : vector<8x128xi1>, vector<8x128xf32>
    %77 = vector.shape_cast %58 : vector<1x1xf32> to vector<1x1xf32>
    %78 = vector.broadcast %77 : vector<1x1xf32> to vector<8x128xf32>
    %79 = arith.select %56, %78, %76 : vector<8x128xi1>, vector<8x128xf32>
    %c0_19 = arith.constant 0 : index
    %c0_20 = arith.constant 0 : index
    %c0_21 = arith.constant 0 : index
    %80 = vector.load %arg4[%c0_19, %c0_20, %c0_21] : memref<1x8x128xf32, #tpu.memory_space<vmem>>, vector<1x8x128xf32>
    %81 = vector.shape_cast %80 : vector<1x8x128xf32> to vector<8x128xf32>
    %82 = vector.shape_cast %79 : vector<8x128xf32> to vector<1x8x128xf32>
    tpu.vector_store %arg4[%c0_19, %c0_20, %c0_21], %82 {strides = array<i32>} : memref<1x8x128xf32, #tpu.memory_space<vmem>>, vector<1x8x128xf32>,
    return
  }
  func.func @transform_0(%arg0: i32) -> (i32, i32, i32) {
    %c0_i32 = arith.constant 0 : i32
    %c0_i32_0 = arith.constant 0 : i32
    %c0_i32_1 = arith.constant 0 : i32
    return %arg0, %c0_i32, %c0_i32_0 : i32, i32, i32
  }
  func.func @transform_1(%arg0: i32) -> (i32, i32, i32) {
    %c0_i32 = arith.constant 0 : i32
    %c0_i32_0 = arith.constant 0 : i32
    %c0_i32_1 = arith.constant 0 : i32
    return %arg0, %c0_i32, %c0_i32_0 : i32, i32, i32
  }
  func.func @transform_2(%arg0: i32) -> (i32, i32, i32) {
    %c0_i32 = arith.constant 0 : i32
    %c0_i32_0 = arith.constant 0 : i32
    %c0_i32_1 = arith.constant 0 : i32
    return %arg0, %c0_i32, %c0_i32_0 : i32, i32, i32
  }
  func.func @transform_3(%arg0: i32) -> (i32, i32, i32) {
    %c0_i32 = arith.constant 0 : i32
    %c0_i32_0 = arith.constant 0 : i32
    %c0_i32_1 = arith.constant 0 : i32
    return %arg0, %c0_i32, %c0_i32_0 : i32, i32, i32
  }
}

</mosaic_0001>

<llo_original>
// kernel: tpu_custom_call.1
$region0: #{tpu_custom_call.1}
  #allocation0 [shape = 'u32[]', space=smem, size = 0x4, offset = 0x4, fixed_abs, tag = 'smem constant byte address 0x4 - core index']
  #allocation1 [shape = 'u32[144,128]{1,0:T(1,128)}', space=vmem, size = 0x12000, scoped, tag = 'internal scratch']
  %s0 = inlined_call_operand.hbm [shape: f32[3,32,128], index: 0, kind: input, shape index: {}]
  %s1 = inlined_call_operand.hbm [shape: f32[3,32,128], index: 1, kind: output, shape index: {0}]
  %s2 = inlined_call_operand.hbm [shape: f32[3,32,128], index: 2, kind: output, shape index: {1}]
  %s3 = inlined_call_operand.hbm [shape: f32[3,8,128], index: 3, kind: output, shape index: {2}]
  %4 = xla_tuple %s1, %s2, %s3
  %s5 = sld [smem:[#allocation0]]
  $region57: #{tpu_custom_call.1} parent=0
    _
  %s7 = ssub.s32 1, %s5
  %s8 = scalar_select 0, %s7, %s5
  $region1: #{tpu_custom_call.1} parent=0
    #allocation2 [shape = 'u8[32768]{0}', space=vmem, size = 0x8000, scoped, tag = 'input window, operand 0']
    #allocation3 [shape = 's32[2]{0}', space=sflag, size = 0x8, scoped, tag = 'scoped memory for tpu_custom_call.1']
    #allocation4 [shape = 's32[2]{0}', space=sflag, size = 0x8, scoped, tag = 'scoped memory for tpu_custom_call.1']
    #allocation5 [shape = 'u8[32768]{0}', space=vmem, size = 0x8000, scoped, tag = 'output window, operand 0']
    #allocation6 [shape = 'u8[32768]{0}', space=vmem, size = 0x8000, scoped, tag = 'output window, operand 1']
    #allocation7 [shape = 's32[2]{0}', space=sflag, size = 0x8, scoped, tag = 'scoped memory for tpu_custom_call.1']
    #allocation8 [shape = 'u8[8192]{0}', space=vmem, size = 0x2000, scoped, tag = 'output window, operand 2']
    %9 = vsyncpa [#allocation3], 0
    %s10 = scalar_lea.sflag [#allocation3], 1
    %11 = vsyncpa %s10, 0
    %12 = vsyncpa [#allocation4], 0
    %s13 = scalar_lea.sflag [#allocation4], 1
    %14 = vsyncpa %s13, 0
    %15 = vsyncpa [#allocation7], 0
    %s16 = scalar_lea.sflag [#allocation7], 1
    %17 = vsyncpa %s16, 0
    loop: start=0, step=1, limit=5
    $region2: #{tpu_custom_call.1} parent=1 // loop_pre_header
      _
    $region3: #{tpu_custom_call.1} parent=1 // loop_header
      %s19 = sphi 0, %s23
      %p20 = scmp.ge.s32.totalorder %s19, 5
      %s29 = sphi 0, %s31
      %s32 = sphi 0, %s29
      %s33 = sphi 0, %s32
      %s49 = sphi 0, %s33
      %s55 = sphi 0, %s57
      %s58 = sphi 0, %s55
      %s59 = sphi 0, %s58
      %s75 = sphi 0, %s59
      %s81 = sphi 0, %s83
      %s84 = sphi 0, %s81
      %s85 = sphi 0, %s84
      %s101 = sphi 0, %s85
      %s107 = sphi 0, %s109
      %s110 = sphi 0, %s107
      %s111 = sphi 0, %s110
      %s127 = sphi 0, %s111
    $region4: #{tpu_custom_call.1} parent=1 // loop_header_branch
      %22 = sbr.rel (%p20) target = $region8
    $region5: #{tpu_custom_call.1} parent=1 // loop_body
      %s24 = ssub.s32 %s19, 1
      %s25 = ssub.s32 %s19, 2
      %s26 = sadd.s32 %s19, 1
      %s27 = ssub.s32 %s19, %s26
      %p28 = scmp.eq.s32.totalorder %s27, 0
      %s30 = sadd.s32 %s29, 1
      %s31 = scalar_select %p28, %s29, %s30
      %p34 = pneg %p28
      %p35 = scmp.eq.s32.totalorder %s19, 2
      %p36 = por %p34, %p35
      %p37 = scmp.ne.s32.totalorder %s29, %s32
      %p38 = scmp.eq.s32.totalorder %s19, 0
      %p39 = por %p37, %p38
      %p40 = scmp.ne.s32.totalorder %s29, %s32
      %p41 = scmp.eq.s32.totalorder %s24, 2
      %p42 = por %p40, %p41
      %p43 = scmp.ne.s32.totalorder %s32, %s33
      %p44 = scmp.eq.s32.totalorder %s24, 0
      %p45 = por %p43, %p44
      %p46 = scmp.ne.s32.totalorder %s32, %s33
      %p47 = scmp.eq.s32.totalorder %s25, 2
      %p48 = por %p46, %p47
      %p50 = scmp.ne.s32.totalorder %s33, %s49
      %p51 = scmp.eq.s32.totalorder %s25, 0
      %p52 = por %p50, %p51
      %s53 = ssub.s32 %s19, %s26
      %p54 = scmp.eq.s32.totalorder %s53, 0
      %s56 = sadd.s32 %s55, 1
      %s57 = scalar_select %p54, %s55, %s56
      %p60 = pneg %p54
      %p61 = scmp.eq.s32.totalorder %s19, 2
      %p62 = por %p60, %p61
      %p63 = scmp.ne.s32.totalorder %s55, %s58
      %p64 = scmp.eq.s32.totalorder %s19, 0
      %p65 = por %p63, %p64
      %p66 = scmp.ne.s32.totalorder %s55, %s58
      %p67 = scmp.eq.s32.totalorder %s24, 2
      %p68 = por %p66, %p67
      %p69 = scmp.ne.s32.totalorder %s58, %s59
      %p70 = scmp.eq.s32.totalorder %s24, 0
      %p71 = por %p69, %p70
      %p72 = scmp.ne.s32.totalorder %s58, %s59
      %p73 = scmp.eq.s32.totalorder %s25, 2
      %p74 = por %p72, %p73
      %p76 = scmp.ne.s32.totalorder %s59, %s75
      %p77 = scmp.eq.s32.totalorder %s25, 0
      %p78 = por %p76, %p77
      %s79 = ssub.s32 %s19, %s26
      %p80 = scmp.eq.s32.totalorder %s79, 0
      %s82 = sadd.s32 %s81, 1
      %s83 = scalar_select %p80, %s81, %s82
      %p86 = pneg %p80
      %p87 = scmp.eq.s32.totalorder %s19, 2
      %p88 = por %p86, %p87
      %p89 = scmp.ne.s32.totalorder %s81, %s84
      %p90 = scmp.eq.s32.totalorder %s19, 0
      %p91 = por %p89, %p90
      %p92 = scmp.ne.s32.totalorder %s81, %s84
      %p93 = scmp.eq.s32.totalorder %s24, 2
      %p94 = por %p92, %p93
      %p95 = scmp.ne.s32.totalorder %s84, %s85
      %p96 = scmp.eq.s32.totalorder %s24, 0
      %p97 = por %p95, %p96
      %p98 = scmp.ne.s32.totalorder %s84, %s85
      %p99 = scmp.eq.s32.totalorder %s25, 2
      %p100 = por %p98, %p99
      %p102 = scmp.ne.s32.totalorder %s85, %s101
      %p103 = scmp.eq.s32.totalorder %s25, 0
      %p104 = por %p102, %p103
      %s105 = ssub.s32 %s19, %s26
      %p106 = scmp.eq.s32.totalorder %s105, 0
      %s108 = sadd.s32 %s107, 1
      %s109 = scalar_select %p106, %s107, %s108
      %p112 = pneg %p106
      %p113 = scmp.eq.s32.totalorder %s19, 2
      %p114 = por %p112, %p113
      %p115 = scmp.ne.s32.totalorder %s107, %s110
      %p116 = scmp.eq.s32.totalorder %s19, 0
      %p117 = por %p115, %p116
      %p118 = scmp.ne.s32.totalorder %s107, %s110
      %p119 = scmp.eq.s32.totalorder %s24, 2
      %p120 = por %p118, %p119
      %p121 = scmp.ne.s32.totalorder %s110, %s111
      %p122 = scmp.eq.s32.totalorder %s24, 0
      %p123 = por %p121, %p122
      %p124 = scmp.ne.s32.totalorder %s110, %s111
      %p125 = scmp.eq.s32.totalorder %s25, 2
      %p126 = por %p124, %p125
      %p128 = scmp.ne.s32.totalorder %s111, %s127
      %p129 = scmp.eq.s32.totalorder %s25, 0
      %p130 = por %p128, %p129
      %p131 = scmp.le.s32.totalorder 1, %s19
      %p132 = scmp.lt.s32.totalorder %s19, 4
      %p133 = pnand %p131, %p132
      %p134 = pneg %p133
      // Predicated region
      $region9: #{tpu_custom_call.1} parent=5 // pred_check
        _
      $region10: #{tpu_custom_call.1} parent=5 // pred_check_branch
        %136 = sbr.rel (%p133) target = $region12
      $region11: #{tpu_custom_call.1} parent=5 // pred_region
        %s137 = ssub.s32 %s19, 1
      $region12: #{tpu_custom_call.1} parent=5 // pred_fallthru
        _
      %p138 = scmp.lt.s32.totalorder %s19, 3
      // Predicated region
      $region13: #{tpu_custom_call.1} parent=5 // pred_check
        %p139 = pneg %p138
      $region14: #{tpu_custom_call.1} parent=5 // pred_check_branch
        %141 = sbr.rel (%p139) target = $region16
      $region15: #{tpu_custom_call.1} parent=5 // pred_region
        // Predicated region
        $region17: #{tpu_custom_call.1} parent=15 // pred_check
          %p142 = pneg %p39
        $region18: #{tpu_custom_call.1} parent=15 // pred_check_branch
          %144 = sbr.rel (%p142) target = $region20
        $region19: #{tpu_custom_call.1} parent=15 // pred_region
          %s145 = sand.u32 %s29, 1
          %s146 = scalar_lea.sflag [#allocation3], %s145
          %s147 = sand.u32 %s29, 1
          %s148 = smul.addr %s147, 32
          %s149 = scalar_lea.vmem [#allocation2], %s148
          %s151 = ssub.s32 512, 512
          %152 = vsyncadd %s146, %s151
          %s153 = smul.addr %s19, 4
          %s154 = smul.addr %s153, 128
          %s155 = scalar_lea.hbm %s0, %s154
          %s156 = sshll.u32 %s149, 4
          %s157 = int_to_ptr.vmem [resolvable:$true] %s156
          %162 = dma.hbm_to_vmem [thread:$0]  %s155, 512, %s157, %s146, 128, 128, 8
        $region20: #{tpu_custom_call.1} parent=15 // pred_fallthru
          _
      $region16: #{tpu_custom_call.1} parent=5 // pred_fallthru
        _
      %p163 = scmp.le.s32.totalorder 1, %s19
      %p164 = scmp.lt.s32.totalorder %s19, 4
      %p165 = pnand %p163, %p164
      %p166 = pneg %p165
      // Predicated region
      $region21: #{tpu_custom_call.1} parent=5 // pred_check
        _
      $region22: #{tpu_custom_call.1} parent=5 // pred_check_branch
        %168 = sbr.rel (%p165) target = $region24
      $region23: #{tpu_custom_call.1} parent=5 // pred_region
        %s169 = ssub.s32 %s19, 1
        %s170 = sand.u32 %s32, 1
        %s171 = scalar_lea.sflag [#allocation3], %s170
        %s172 = sand.u32 %s32, 1
        %s173 = smul.addr %s172, 32
        %s174 = scalar_lea.vmem [#allocation2], %s173
        // Predicated region
        $region25: #{tpu_custom_call.1} parent=23 // pred_check
          %p175 = pneg %p45
        $region26: #{tpu_custom_call.1} parent=23 // pred_check_branch
          %177 = sbr.rel (%p175) target = $region28
        $region27: #{tpu_custom_call.1} parent=23 // pred_region
          %178 = dma.done %s171, 512
        $region28: #{tpu_custom_call.1} parent=23 // pred_fallthru
          _
        %s179 = sand.u32 %s32, 1
        %s180 = scalar_lea.sflag [#allocation3], %s179
        %s181 = sand.u32 %s32, 1
        %s182 = smul.addr %s181, 32
        %s183 = scalar_lea.vmem [#allocation2], %s182
        %p184 = pneg %p45
        %p185 = pneg %p42
        %p186 = pneg %p71
        %p187 = pneg %p68
        %s188 = sand.u32 %s58, 1
        %s189 = scalar_lea.sflag [#allocation4], %s188
        %s190 = sand.u32 %s58, 1
        %s191 = smul.addr %s190, 32
        %s192 = scalar_lea.vmem [#allocation5], %s191
        %p193 = pneg %p97
        %p194 = pneg %p94
        %s195 = sand.u32 %s24, 1
        %s196 = scalar_lea.sflag [#allocation7], %s195
        %s197 = sand.u32 %s84, 1
        %s198 = smul.addr %s197, 32
        %s199 = scalar_lea.vmem [#allocation6], %s198
        %p200 = pneg %p123
        %p201 = pneg %p120
        %s202 = sand.u32 %s24, 1
        %s203 = scalar_lea.sflag [#allocation7], %s202
        %s204 = sand.u32 %s110, 1
        %s205 = smul.addr %s204, 8
        %s206 = scalar_lea.vmem [#allocation8], %s205
        %v207 = vld [vmem:[%s174] sm:$0xff]
        %v208 = vld [vmem:[%s174 + $0x8] sm:$0xff]
        %v209 = vld [vmem:[%s174 + $0x10] sm:$0xff]
        %v210 = vld [vmem:[%s174 + $0x18] sm:$0xff]
        %v211 = vrot.slane %v207, 1
        %v212 = vrot.slane %v208, 1
        %v213 = vrot.slane %v209, 1
        %v214 = vrot.slane %v210, 1
        %v215 = vlaneseq
        %v216 = vshrl.u32 %v215, 7
        %vm217 = vcmp.lt.s32.totalorder %v216, 7
        %v218 = vsel %vm217, %v213, %v214
        %v219 = vsel %vm217, %v212, %v213
        %v220 = vsel %vm217, %v211, %v212
        %v221 = vsel %vm217, %v214, %v211
        %222 = vrot.lane.b32.xlu0 %v207, 127
        %v223 = vpop.permute.xlu0 %222
        %224 = vrot.lane.b32.xlu0 %v208, 127
        %v225 = vpop.permute.xlu0 %224
        %226 = vrot.lane.b32.xlu0 %v209, 127
        %v227 = vpop.permute.xlu0 %226
        %228 = vrot.lane.b32.xlu0 %v210, 127
        %v229 = vpop.permute.xlu0 %228
        %v230 = vadd.s32 %v216, 8
        %v231 = vadd.s32 %v216, 16
        %v232 = vadd.s32 %v216, 24
        %v233 = vlaneseq
        %v234 = vand.u32 %v233, 127
        %vm235 = vcmp.lt.s32.totalorder %v216, 31
        %vm236 = vcmp.lt.s32.totalorder %v230, 31
        %vm237 = vcmp.lt.s32.totalorder %v231, 31
        %vm238 = vcmp.lt.s32.totalorder %v232, 31
        %v239 = vsub.f32 %v220, %v207
        %v240 = vsub.f32 %v219, %v208
        %v241 = vsub.f32 %v218, %v209
        %v242 = vsub.f32 %v221, %v210
        %v243 = vsel %vm235, %v239, 0.0
        %v244 = vsel %vm236, %v240, 0.0
        %v245 = vsel %vm237, %v241, 0.0
        %v246 = vsel %vm238, %v242, 0.0
        %vm247 = vcmp.lt.s32.totalorder %v234, 127
        %v248 = vsub.f32 %v223, %v207
        %v249 = vsub.f32 %v225, %v208
        %v250 = vsub.f32 %v227, %v209
        %v251 = vsub.f32 %v229, %v210
        %v252 = vsel %vm247, %v248, 0.0
        %v253 = vsel %vm247, %v249, 0.0
        %v254 = vsel %vm247, %v250, 0.0
        %v255 = vsel %vm247, %v251, 0.0
        %v256 = vmin.f32 %v243, %v244
        %v257 = vmin.f32 %v245, %v246
        %v258 = vmin.f32 %v256, %v257
        %259 = vmin.xlane.f32.xlu0 %v258
        %v260 = vpop.xlane.xlu0 %259
        %v261 = vrot.slane %v260, 4
        %v262 = vmin.f32 %v260, %v261
        %v263 = vrot.slane %v262, 2
        %v264 = vmin.f32 %v262, %v263
        %v265 = vrot.slane %v264, 1
        %v266 = vmin.f32 %v264, %v265
        %s267 = vtos %v266
        %v268 = vstv %s267
        %v269 = vmax.f32 %v243, %v244
        %v270 = vmax.f32 %v245, %v246
        %v271 = vmax.f32 %v269, %v270
        %272 = vmax.xlane.f32.xlu0 %v271
        %v273 = vpop.xlane.xlu0 %272
        %v274 = vrot.slane %v273, 4
        %v275 = vmax.f32 %v273, %v274
        %v276 = vrot.slane %v275, 2
        %v277 = vmax.f32 %v275, %v276
        %v278 = vrot.slane %v277, 1
        %v279 = vmax.f32 %v277, %v278
        %s280 = vtos %v279
        %v281 = vstv %s280
        %v282 = vsub.f32 %v281, %v268
        %v283 = vmin.f32 %v252, %v253
        %v284 = vmin.f32 %v254, %v255
        %v285 = vmin.f32 %v283, %v284
        %286 = vmin.xlane.f32.xlu0 %v285
        %v287 = vpop.xlane.xlu0 %286
        %v288 = vrot.slane %v287, 4
        %v289 = vmin.f32 %v287, %v288
        %v290 = vrot.slane %v289, 2
        %v291 = vmin.f32 %v289, %v290
        %v292 = vrot.slane %v291, 1
        %v293 = vmin.f32 %v291, %v292
        %s294 = vtos %v293
        %v295 = vstv %s294
        %v296 = vmax.f32 %v252, %v253
        %v297 = vmax.f32 %v254, %v255
        %v298 = vmax.f32 %v296, %v297
        %299 = vmax.xlane.f32.xlu0 %v298
        %v300 = vpop.xlane.xlu0 %299
        %v301 = vrot.slane %v300, 4
        %v302 = vmax.f32 %v300, %v301
        %v303 = vrot.slane %v302, 2
        %v304 = vmax.f32 %v302, %v303
        %v305 = vrot.slane %v304, 1
        %v306 = vmax.f32 %v304, %v305
        %s307 = vtos %v306
        %v308 = vstv %s307
        %v309 = vsub.f32 %v308, %v295
        %v310 = vrcp.pop %v282
        %v311 = vrcp.pop %v309
        %v312 = vsub.f32 %v243, %v268
        %v313 = vsub.f32 %v244, %v268
        %v314 = vsub.f32 %v245, %v268
        %v315 = vsub.f32 %v246, %v268
        %v316 = vmul.f32 %v312, %v310
        %v317 = vmul.f32 %v313, %v310
        %v318 = vmul.f32 %v314, %v310
        %v319 = vmul.f32 %v315, %v310
        %320 = vst [vmem:[%s192] sm:$0xff] %v316
        %321 = vst [vmem:[%s192 + $0x8] sm:$0xff] %v317
        %322 = vst [vmem:[%s192 + $0x10] sm:$0xff] %v318
        %323 = vst [vmem:[%s192 + $0x18] sm:$0xff] %v319
        %v324 = vsub.f32 %v252, %v295
        %v325 = vsub.f32 %v253, %v295
        %v326 = vsub.f32 %v254, %v295
        %v327 = vsub.f32 %v255, %v295
        %v328 = vmul.f32 %v324, %v311
        %v329 = vmul.f32 %v325, %v311
        %v330 = vmul.f32 %v326, %v311
        %v331 = vmul.f32 %v327, %v311
        %332 = vst [vmem:[%s199] sm:$0xff] %v328
        %333 = vst [vmem:[%s199 + $0x8] sm:$0xff] %v329
        %334 = vst [vmem:[%s199 + $0x10] sm:$0xff] %v330
        %335 = vst [vmem:[%s199 + $0x18] sm:$0xff] %v331
        %vm336 = vcmp.eq.s32.totalorder %v234, 0
        %v337 = vmul.f32 %v268, 2.0
        %vm338 = vcmp.eq.s32.totalorder %v234, 1
        %v339 = vmul.f32 %v282, 2.0
        %vm340 = vcmp.eq.s32.totalorder %v234, 2
        %v341 = vmul.f32 %v295, 2.0
        %v342 = vmul.f32 %v309, 2.0
        %v343 = vsel %vm340, %v341, %v342
        %v344 = vsel %vm338, %v339, %v343
        %v345 = vsel %vm336, %v337, %v344
        %346 = vst [vmem:[%s206] sm:$0xff] %v345
        %s347 = sand.u32 %s58, 1
        %s348 = scalar_lea.sflag [#allocation4], %s347
        %s349 = sand.u32 %s58, 1
        %s350 = smul.addr %s349, 32
        %s351 = scalar_lea.vmem [#allocation5], %s350
        %s352 = sand.u32 %s24, 1
        %s353 = scalar_lea.sflag [#allocation7], %s352
        %s354 = sand.u32 %s84, 1
        %s355 = smul.addr %s354, 32
        %s356 = scalar_lea.vmem [#allocation6], %s355
        %s357 = sand.u32 %s24, 1
        %s358 = scalar_lea.sflag [#allocation7], %s357
        %s359 = sand.u32 %s110, 1
        %s360 = smul.addr %s359, 8
        %s361 = scalar_lea.vmem [#allocation8], %s360
        // Predicated region
        $region29: #{tpu_custom_call.1} parent=23 // pred_check
          %p362 = pneg %p68
        $region30: #{tpu_custom_call.1} parent=23 // pred_check_branch
          %364 = sbr.rel (%p362) target = $region32
        $region31: #{tpu_custom_call.1} parent=23 // pred_region
          %s366 = ssub.s32 512, 512
          %367 = vsyncadd %s348, %s366
          %s368 = smul.addr %s24, 4
          %s369 = smul.addr %s368, 128
          %s370 = scalar_lea.hbm %s1, %s369
          %s371 = sshll.u32 %s351, 4
          %s372 = int_to_ptr.vmem [resolvable:$true] %s371
          %377 = dma.vmem_to_hbm [thread:$0]  %s372, 512, %s370, %s348, 128, 128, 8
        $region32: #{tpu_custom_call.1} parent=23 // pred_fallthru
          _
        // Predicated region
        $region33: #{tpu_custom_call.1} parent=23 // pred_check
          %p378 = pneg %p94
        $region34: #{tpu_custom_call.1} parent=23 // pred_check_branch
          %380 = sbr.rel (%p378) target = $region36
        $region35: #{tpu_custom_call.1} parent=23 // pred_region
          %s382 = ssub.s32 512, 512
          %383 = vsyncadd %s353, %s382
          %s384 = smul.addr %s24, 4
          %s385 = smul.addr %s384, 128
          %s386 = scalar_lea.hbm %s2, %s385
          %s387 = sshll.u32 %s356, 4
          %s388 = int_to_ptr.vmem [resolvable:$true] %s387
          %393 = dma.vmem_to_hbm [thread:$0]  %s388, 512, %s386, %s353, 128, 128, 8
        $region36: #{tpu_custom_call.1} parent=23 // pred_fallthru
          _
        // Predicated region
        $region37: #{tpu_custom_call.1} parent=23 // pred_check
          %p394 = pneg %p120
        $region38: #{tpu_custom_call.1} parent=23 // pred_check_branch
          %396 = sbr.rel (%p394) target = $region40
        $region39: #{tpu_custom_call.1} parent=23 // pred_region
          %s398 = ssub.s32 128, 128
          %399 = vsyncadd %s358, %s398
          %s400 = smul.addr %s24, 128
          %s401 = scalar_lea.hbm %s3, %s400
          %s403 = sshll.u32 %s361, 4
          %s404 = int_to_ptr.vmem [resolvable:$true] %s403
          %406 = dma.vmem_to_hbm [thread:$0]  %s404, 128, %s401, %s358
        $region40: #{tpu_custom_call.1} parent=23 // pred_fallthru
          _
      $region24: #{tpu_custom_call.1} parent=5 // pred_fallthru
        _
      %p407 = scmp.le.s32.totalorder 2, %s19
      // Predicated region
      $region41: #{tpu_custom_call.1} parent=5 // pred_check
        %p408 = pneg %p407
      $region42: #{tpu_custom_call.1} parent=5 // pred_check_branch
        %410 = sbr.rel (%p408) target = $region44
      $region43: #{tpu_custom_call.1} parent=5 // pred_region
        %s411 = ssub.s32 %s19, 2
        // Predicated region
        $region45: #{tpu_custom_call.1} parent=43 // pred_check
          %p412 = pneg %p74
        $region46: #{tpu_custom_call.1} parent=43 // pred_check_branch
          %414 = sbr.rel (%p412) target = $region48
        $region47: #{tpu_custom_call.1} parent=43 // pred_region
          %s415 = sand.u32 %s59, 1
          %s416 = scalar_lea.sflag [#allocation4], %s415
          %s417 = sand.u32 %s59, 1
          %s418 = smul.addr %s417, 32
          %s419 = scalar_lea.vmem [#allocation5], %s418
          %420 = dma.done %s416, 512
        $region48: #{tpu_custom_call.1} parent=43 // pred_fallthru
          _
        // Predicated region
        $region49: #{tpu_custom_call.1} parent=43 // pred_check
          %p421 = pneg %p100
        $region50: #{tpu_custom_call.1} parent=43 // pred_check_branch
          %423 = sbr.rel (%p421) target = $region52
        $region51: #{tpu_custom_call.1} parent=43 // pred_region
          %s424 = sand.u32 %s25, 1
          %s425 = scalar_lea.sflag [#allocation7], %s424
          %s426 = sand.u32 %s85, 1
          %s427 = smul.addr %s426, 32
          %s428 = scalar_lea.vmem [#allocation6], %s427
          %429 = dma.done %s425, 512
        $region52: #{tpu_custom_call.1} parent=43 // pred_fallthru
          _
        // Predicated region
        $region53: #{tpu_custom_call.1} parent=43 // pred_check
          %p430 = pneg %p126
        $region54: #{tpu_custom_call.1} parent=43 // pred_check_branch
          %432 = sbr.rel (%p430) target = $region56
        $region55: #{tpu_custom_call.1} parent=43 // pred_region
          %s433 = sand.u32 %s25, 1
          %s434 = scalar_lea.sflag [#allocation7], %s433
          %s435 = sand.u32 %s111, 1
          %s436 = smul.addr %s435, 8
          %s437 = scalar_lea.vmem [#allocation8], %s436
          %438 = dma.done %s434, 128
        $region56: #{tpu_custom_call.1} parent=43 // pred_fallthru
          _
      $region44: #{tpu_custom_call.1} parent=5 // pred_fallthru
        _
    $region6: #{tpu_custom_call.1} parent=1 // loop_footer
      %s23 = sadd.s32 1, %s19
    $region7: #{tpu_custom_call.1} parent=1 // loop_footer_branch
      %18 = sbr.rel target = $region3
    $region8: #{tpu_custom_call.1} parent=1 // loop_exit
      _
    %439 = vsyncpa [#allocation3], 1
    %s440 = scalar_lea.sflag [#allocation3], 1
    %441 = vsyncpa %s440, 1
    %442 = vsyncpa [#allocation4], 1
    %s443 = scalar_lea.sflag [#allocation4], 1
    %444 = vsyncpa %s443, 1
    %445 = vsyncpa [#allocation7], 1
    %s446 = scalar_lea.sflag [#allocation7], 1
    %447 = vsyncpa %s446, 1

</llo_original>
